<compile_context>
chip_gen: v7x
topology: tpu7x:2x2x1
jax: 0.10.0
libtpu: 0.0.40
codegen_flags: <defaults>
</compile_context>

<pallas_src>
import math

import jax
import jax.numpy as jnp
import numpy as np
from jax.experimental import pallas as pl
from jax.experimental.pallas import tpu as pltpu


def _round_up(a, b):
    return ((a + b - 1) // b) * b


# ----------------------------- MLM kernel -----------------------------------
def _mlm_kernel(cnt_ref,                                    # scalar prefetch (SMEM)
                x_ref, tgt_ref, w1_ref, prm_ref, w2_ref, b2_ref,
                out_ref,
                m_sc, l_sc, tl_sc, av_sc, ai_sc, h_sc):
    i = pl.program_id(0)          # row-tile index ("parallel")
    v = pl.program_id(1)          # vocab-tile index ("arbitrary" reduction)
    nv = pl.num_programs(1)

    TM = x_ref.shape[0]
    E = w1_ref.shape[1]
    TV = w2_ref.shape[1]

    # Masked rows were sorted to the front on the host; a row tile has work
    # only if its first row index is below the masked-row count.
    has_work = (i * TM) < cnt_ref[0]
    first_v = v == 0
    last_v = v == nv - 1

    # Only the no-work path needs an explicit zero of its output slab
    # (the has_work finalize below overwrites the whole slab).
    @pl.when(jnp.logical_and(first_v, jnp.logical_not(has_work)))
    def _():
        out_ref[...] = jnp.zeros_like(out_ref)

    # Per-row-tile prologue: Linear(H->E) + erf-gelu + LayerNorm, cached in
    # h_sc (bf16) for all V-chunks, plus init of the online-softmax carries.
    @pl.when(jnp.logical_and(has_work, first_v))
    def _():
        b1 = prm_ref[0:1, :]                                 # (1, E) f32
        gma = prm_ref[1:2, :]
        bta = prm_ref[2:3, :]
        x = x_ref[...]                                       # bf16 [TM, H]
        h = jnp.dot(x, w1_ref[...],
                    preferred_element_type=jnp.float32) + b1
        # gelu (erf form, as in UER)
        h = 0.5 * h * (1.0 + jax.lax.erf(h * (1.0 / math.sqrt(2.0))))
        # UER LayerNorm: gamma * (x - mean) / (std_unbiased + eps) + beta
        mean = jnp.mean(h, axis=-1, keepdims=True)
        d = h - mean
        std = jnp.sqrt(jnp.sum(d * d, axis=-1, keepdims=True) / (E - 1))
        h = gma * d / (std + 1e-6) + bta
        h_sc[...] = h.astype(h_sc.dtype)                     # bf16 cache

        m_sc[...] = jnp.full(m_sc.shape, -jnp.inf, m_sc.dtype)
        l_sc[...] = jnp.zeros(l_sc.shape, l_sc.dtype)
        tl_sc[...] = jnp.zeros(tl_sc.shape, tl_sc.dtype)
        av_sc[...] = jnp.full(av_sc.shape, -jnp.inf, av_sc.dtype)
        ai_sc[...] = jnp.full(ai_sc.shape, jnp.iinfo(jnp.int32).max, ai_sc.dtype)

    # Per V-chunk: streamed vocab matmul + online softmax / NLL gather / argmax.
    @pl.when(has_work)
    def _():
        logits = (jnp.dot(h_sc[...], w2_ref[...],
                          preferred_element_type=jnp.float32)
                  + b2_ref[...])                             # f32 [TM, TV]

        chunk_max = jnp.max(logits, axis=-1, keepdims=True)  # [TM, 1]
        m_prev = m_sc[...]
        m_new = jnp.maximum(m_prev, chunk_max)
        l_sc[...] = (l_sc[...] * jnp.exp(m_prev - m_new)
                     + jnp.sum(jnp.exp(logits - m_new), axis=-1, keepdims=True))
        m_sc[...] = m_new

        tgt = tgt_ref[...]                                   # int32 [TM, 1]
        # (1, TV) lane iota; broadcasting handles the row dimension.
        g_iota = v * TV + jax.lax.broadcasted_iota(jnp.int32, (1, TV), 1)
        # Each global target index lives in exactly one chunk -> sum accumulates
        # the target logit without materializing a full one-hot.
        tl_sc[...] += jnp.sum(jnp.where(g_iota == tgt, logits, 0.0),
                              axis=-1, keepdims=True)

        # Running argmax with first-index tie-break across chunks.
        cand = jnp.min(jnp.where(logits == chunk_max, g_iota,
                                 jnp.iinfo(jnp.int32).max),
                       axis=-1, keepdims=True)
        take = chunk_max > av_sc[...]
        ai_sc[...] = jnp.where(take, cand, ai_sc[...])
        av_sc[...] = jnp.where(take, chunk_max, av_sc[...])

    # Finalize: masked NLL sum, masked count, masked correct-count.
    @pl.when(jnp.logical_and(has_work, last_v))
    def _():
        lse = m_sc[...] + jnp.log(l_sc[...])
        logp_t = tl_sc[...] - lse                            # [TM, 1]
        tgt = tgt_ref[...]
        mask = tgt > 0
        maskf = mask.astype(jnp.float32)
        neg_sum = jnp.sum(-logp_t * maskf)
        cnt = jnp.sum(maskf)
        correct = jnp.sum(jnp.where(jnp.logical_and(mask, ai_sc[...] == tgt),
                                    1.0, 0.0))

        lane = jax.lax.broadcasted_iota(jnp.int32, out_ref.shape, 1)
        subl = jax.lax.broadcasted_iota(jnp.int32, out_ref.shape, 0)
        vals = jnp.where(lane == 0, neg_sum,
                         jnp.where(lane == 1, cnt,
                                   jnp.where(lane == 2, correct, 0.0)))
        out_ref[...] = jnp.where(subl == 0, vals, 0.0)


# ------------------------ one-time weight preparation ------------------------
def prepare_mlm_weights(w1, b1, gamma, beta, w2, b2, *, tv=2048):
    """Cast / pad MLM weights once, outside the per-step path."""
    H, E = w1.shape
    V = w2.shape[1]
    tv_eff = int(min(tv, _round_up(V, 128)))
    V_pad = _round_up(V, tv_eff)

    w1_b = jnp.asarray(w1, jnp.bfloat16)
    # b1 / gamma / beta packed into one (8, E) slab -> single BlockSpec/DMA.
    prm = jnp.zeros((8, E), jnp.float32)
    prm = prm.at[0].set(jnp.asarray(b1, jnp.float32).reshape(E))
    prm = prm.at[1].set(jnp.asarray(gamma, jnp.float32).reshape(E))
    prm = prm.at[2].set(jnp.asarray(beta, jnp.float32).reshape(E))

    w2_p = jnp.zeros((E, V_pad), jnp.bfloat16).at[:, :V].set(
        jnp.asarray(w2, jnp.bfloat16))
    # Padded vocab columns get a -1e30 bias (finite!) so max/lse/argmax are
    # unaffected and the exp(m_prev - m_new) carry stays NaN-free.
    b2_p = jnp.full((1, V_pad), -1e30, jnp.float32).at[:, :V].set(
        jnp.asarray(b2, jnp.float32).reshape(1, V))

    return dict(w1=w1_b, prm=prm, w2=w2_p, b2=b2_p,
                H=H, E=E, V=V, V_pad=V_pad, tv=tv_eff)


# ------------------------------- MLM wrapper ---------------------------------
def mlm_pallas(x_rows, tgt_rows, prep, *, tm=256, row_budget=None,
               w2_buffers=2, vmem_limit_bytes=None,
               dim_semantics=("parallel", "arbitrary")):
    """MLM head.

    Per-generation tuning (perf review):
      v6e: tm=512, tv=2048.
      v5e: tm=256 (not 128), w2_buffers=3 and/or tv=4096; raise
           vmem_limit_bytes if needed (scoped default is 16 MiB).
      v7x: tm=256, set vmem_limit_bytes explicitly with headroom (64 MiB
           physical VMEM); switch dim_semantics[0] to pltpu.CORE_PARALLEL if
           the trace shows one TensorCore idle.

    `row_budget` must be a static Python int (e.g. ceil(1.25 * mask_rate * N));
    if the real masked count exceeds it, surplus masked rows are dropped and
    the loss becomes an approximation.
    """
    assert tm % 8 == 0
    N, H = x_rows.shape
    E = prep["E"]
    V_pad = prep["V_pad"]
    tv_eff = prep["tv"]

    tgt_flat = tgt_rows.reshape(-1).astype(jnp.int32)
    num_masked_all = jnp.sum(tgt_flat > 0).astype(jnp.int32)

    budget = N if row_budget is None else max(1, min(int(row_budget), N))

    # Host-side compaction: masked rows first; gather ONLY the budgeted rows
    # and cast them to bf16 (budget*H*2 bytes instead of a full f32 gather).
    order = jnp.argsort((tgt_flat <= 0).astype(jnp.int32))
    keep = order[:budget]
    x_sel = jnp.take(x_rows, keep, axis=0).astype(jnp.bfloat16)
    tgt_sel = jnp.take(tgt_flat, keep, axis=0)

    tm_eff = int(min(tm, _round_up(budget, 8)))
    N_rows = _round_up(budget, tm_eff)

    x_p = jnp.zeros((N_rows, H), jnp.bfloat16).at[:budget].set(x_sel)
    tgt_p = jnp.zeros((N_rows, 1), jnp.int32).at[:budget, 0].set(tgt_sel)
    num_masked = jnp.minimum(num_masked_all, jnp.int32(budget)).reshape(1)

    n_row_tiles = N_rows // tm_eff
    n_v_tiles = V_pad // tv_eff

    w2_kwargs = {}
    if w2_buffers is not None and int(w2_buffers) > 2:
        w2_kwargs["pipeline_mode"] = pl.Buffered(int(w2_buffers))

    grid_spec = pltpu.PrefetchScalarGridSpec(
        num_scalar_prefetch=1,
        grid=(n_row_tiles, n_v_tiles),
        in_specs=[
            pl.BlockSpec((tm_eff, H), lambda i, v, cnt: (i, 0)),        # x bf16
            pl.BlockSpec((tm_eff, 1), lambda i, v, cnt: (i, 0)),        # tgt
            pl.BlockSpec((H, E), lambda i, v, cnt: (0, 0)),             # w1 bf16
            pl.BlockSpec((8, E), lambda i, v, cnt: (0, 0)),             # b1/gamma/beta
            pl.BlockSpec((E, tv_eff), lambda i, v, cnt: (0, v), **w2_kwargs),
            pl.BlockSpec((1, tv_eff), lambda i, v, cnt: (0, v)),        # b2 chunk
        ],
        out_specs=pl.BlockSpec((8, 128), lambda i, v, cnt: (i, 0)),
        scratch_shapes=[
            pltpu.VMEM((tm_eff, 1), jnp.float32),    # running max
            pltpu.VMEM((tm_eff, 1), jnp.float32),    # running sum-exp
            pltpu.VMEM((tm_eff, 1), jnp.float32),    # target logit
            pltpu.VMEM((tm_eff, 1), jnp.float32),    # argmax value
            pltpu.VMEM((tm_eff, 1), jnp.int32),      # argmax index
            pltpu.VMEM((tm_eff, E), jnp.bfloat16),   # cached post-LN h
        ],
    )

    flops = 2 * N_rows * H * E + 2 * N_rows * E * V_pad
    transcendentals = N_rows * V_pad + N_rows * E
    bytes_accessed = (N_rows * H * 2 + N_rows * 4
                      + n_row_tiles * (E * V_pad * 2 + V_pad * 4)
                      + H * E * 2 + 8 * E * 4
                      + n_row_tiles * 8 * 128 * 4)

    cp_kwargs = dict(dimension_semantics=tuple(dim_semantics))
    if vmem_limit_bytes is not None:
        cp_kwargs["vmem_limit_bytes"] = int(vmem_limit_bytes)

    acc = pl.pallas_call(
        _mlm_kernel,
        out_shape=jax.ShapeDtypeStruct((n_row_tiles * 8, 128), jnp.float32),
        grid_spec=grid_spec,
        compiler_params=pltpu.CompilerParams(**cp_kwargs),
        cost_estimate=pl.CostEstimate(flops=flops,
                                      transcendentals=transcendentals,
                                      bytes_accessed=bytes_accessed),
    )(num_masked, x_p, tgt_p, prep["w1"], prep["prm"], prep["w2"], prep["b2"])

    sums = jnp.sum(acc, axis=0)                      # reduce per-tile partials
    sum_nll, cnt, correct = sums[0], sums[1], sums[2]
    denominator = cnt + 1e-6
    loss_mlm = sum_nll / denominator
    return loss_mlm, correct, denominator


# --------------------------- module wrapper ----------------------------------
def albert_target_forward(memory_bank, tgt_mlm, tgt_sop, params, *,
                          prep=None, tm=256, tv=2048, row_budget=None,
                          w2_buffers=2, vmem_limit_bytes=None,
                          dim_semantics=("parallel", "arbitrary")):
    B, S, H = memory_bank.shape
    x_rows = memory_bank.reshape(B * S, H)
    tgt_rows = tgt_mlm.reshape(B * S, 1).astype(jnp.int32)

    if prep is None:
        prep = prepare_mlm_weights(params["mlm_w1"], params["mlm_b1"],
                                   params["ln_gamma"], params["ln_beta"],
                                   params["mlm_w2"], params["mlm_b2"], tv=tv)

    loss_mlm, correct_mlm, denominator = mlm_pallas(
        x_rows, tgt_rows, prep, tm=tm, row_budget=row_budget,
        w2_buffers=w2_buffers, vmem_limit_bytes=vmem_limit_bytes,
        dim_semantics=dim_semantics)

    # SOP head: microscopic (B x H x 2) compute — left to plain XLA; a
    # dedicated pallas_call costs more in launch/DMA than the math.
    x_cls = memory_bank[:, 0, :].astype(jnp.float32)
    hs = jnp.tanh(x_cls @ params["sop_w1"] + params["sop_b1"])
    logits_s = hs @ params["sop_w2"] + params["sop_b2"]
    logp_s = jax.nn.log_softmax(logits_s, axis=-1)
    t = tgt_sop.astype(jnp.int32)
    loss_sop = -jnp.mean(jnp.take_along_axis(logp_s, t[:, None], 1)[:, 0])
    correct_sop = jnp.sum((jnp.argmax(logits_s, -1) == t).astype(jnp.float32))

    return loss_mlm, loss_sop, correct_mlm, correct_sop, denominator


# --------------------------- plain-JAX reference -----------------------------
def reference_forward(memory_bank, tgt_mlm, tgt_sop, params):
    B, S, H = memory_bank.shape
    E = params["mlm_w1"].shape[1]
    # Mirror the kernel's bf16 MXU operands (f32 accumulation, f32 elementwise).
    x = memory_bank.reshape(-1, H).astype(jnp.bfloat16)
    h = jnp.dot(x, params["mlm_w1"].astype(jnp.bfloat16),
                preferred_element_type=jnp.float32) + params["mlm_b1"]
    h = 0.5 * h * (1.0 + jax.lax.erf(h / math.sqrt(2.0)))
    mean = h.mean(-1, keepdims=True)
    d = h - mean
    std = jnp.sqrt((d * d).sum(-1, keepdims=True) / (E - 1))
    h = params["ln_gamma"] * d / (std + 1e-6) + params["ln_beta"]
    logits = jnp.dot(h.astype(jnp.bfloat16),
                     params["mlm_w2"].astype(jnp.bfloat16),
                     preferred_element_type=jnp.float32) + params["mlm_b2"]
    logp = jax.nn.log_softmax(logits, -1)
    t = tgt_mlm.reshape(-1)
    mask = t > 0
    logp_t = jnp.take_along_axis(logp, t[:, None], 1)[:, 0]
    cnt = mask.sum().astype(jnp.float32)
    denom = cnt + 1e-6
    loss_mlm = jnp.sum(jnp.where(mask, -logp_t, 0.0)) / denom
    correct_mlm = jnp.sum(((jnp.argmax(logits, -1) == t) & mask).astype(jnp.float32))

    x_cls = memory_bank[:, 0, :]
    hs = jnp.tanh(x_cls @ params["sop_w1"] + params["sop_b1"])
    logits_s = hs @ params["sop_w2"] + params["sop_b2"]
    logp_s = jax.nn.log_softmax(logits_s, -1)
    loss_sop = -jnp.mean(jnp.take_along_axis(logp_s, tgt_sop[:, None], 1)[:, 0])
    correct_sop = jnp.sum((jnp.argmax(logits_s, -1) == tgt_sop).astype(jnp.float32))
    return loss_mlm, loss_sop, correct_mlm, correct_sop, denom


if __name__ == "__main__":
    B, S, H, E, V = 2, 8, 32, 16, 512

    key = jax.random.PRNGKey(0)
    ks = jax.random.split(key, 12)

    memory_bank = jax.random.normal(ks[0], (B, S, H), jnp.float32)
    # ~30% of positions are masked tokens (tgt > 0), others 0 (ignored)
    is_masked = jax.random.bernoulli(ks[1], 0.3, (B, S))
    tok = jax.random.randint(ks[2], (B, S), 1, V)
    tgt_mlm = jnp.where(is_masked, tok, 0).astype(jnp.int32)
    tgt_sop = jax.random.randint(ks[3], (B,), 0, 2).astype(jnp.int32)

    init = lambda k, shape: 0.02 * jax.random.normal(k, shape, jnp.float32)
    params = {
        "mlm_w1": init(ks[4], (H, E)),
        "mlm_b1": init(ks[5], (1, E)),
        "ln_gamma": jnp.ones((1, E), jnp.float32),
        "ln_beta": jnp.zeros((1, E), jnp.float32),
        "mlm_w2": init(ks[6], (E, V)),
        "mlm_b2": init(ks[7], (1, V)),
        "sop_w1": init(ks[10], (H, H)),
        "sop_b1": init(ks[11], (1, H)),
        "sop_w2": init(ks[8], (H, 2)),
        "sop_b2": init(ks[9], (1, 2)),
    }

    # One-time weight prep (hoisted out of the per-step path).  Small tiles at
    # toy shapes so V-chunked online softmax, multiple row tiles and the
    # empty-tile skip path are all exercised.  Production defaults: tm=256
    # (512 on v6e), tv=2048.
    prep = prepare_mlm_weights(params["mlm_w1"], params["mlm_b1"],
                               params["ln_gamma"], params["ln_beta"],
                               params["mlm_w2"], params["mlm_b2"], tv=128)

    ref = reference_forward(memory_bank, tgt_mlm, tgt_sop, params)

    # 1) capped grid: static masked-row budget (>= actual masked count).
    n_masked = int(jax.device_get(jnp.sum(tgt_mlm > 0)))
    budget = max(1, n_masked)
    out_budget = albert_target_forward(memory_bank, tgt_mlm, tgt_sop, params,
                                       prep=prep, tm=8, row_budget=budget)
    out_budget = jax.block_until_ready(out_budget)
    for a, b in zip(out_budget, ref):
        np.testing.assert_allclose(np.asarray(a), np.asarray(b),
                                   rtol=2e-3, atol=2e-3)

    # 2) un-capped path: exercises the pl.when empty-row-tile skip.
    out_full = albert_target_forward(memory_bank, tgt_mlm, tgt_sop, params,
                                     prep=prep, tm=8, row_budget=None)
    out_full = jax.block_until_ready(out_full)
    for a, b in zip(out_full, ref):
        np.testing.assert_allclose(np.asarray(a), np.asarray(b),
                                   rtol=2e-3, atol=2e-3)

    print("KERNEL_OK")
</pallas_src>

<mosaic_0001>
module attributes {stable_mosaic.version = 11 : i64} {
  func.func @_mlm_kernel(%arg0: i32, %arg1: i32, %arg2: memref<1xi32, #tpu.memory_space<smem>>, %arg3: memref<8x32xbf16, #tpu.memory_space<vmem>>, %arg4: memref<8x1xi32, #tpu.memory_space<vmem>>, %arg5: memref<32x16xbf16, #tpu.memory_space<vmem>>, %arg6: memref<8x16xf32, #tpu.memory_space<vmem>>, %arg7: memref<16x128xbf16, #tpu.memory_space<vmem>>, %arg8: memref<1x128xf32, #tpu.memory_space<vmem>>, %arg9: memref<8x128xf32, #tpu.memory_space<vmem>>, %arg10: memref<8x1xf32, #tpu.memory_space<vmem>>, %arg11: memref<8x1xf32, #tpu.memory_space<vmem>>, %arg12: memref<8x1xf32, #tpu.memory_space<vmem>>, %arg13: memref<8x1xf32, #tpu.memory_space<vmem>>, %arg14: memref<8x1xi32, #tpu.memory_space<vmem>>, %arg15: memref<8x16xbf16, #tpu.memory_space<vmem>>) attributes {dimension_semantics = [#tpu.dimension_semantics<parallel>, #tpu.dimension_semantics<arbitrary>], iteration_bounds = array<i64: 1, 4>, scalar_prefetch = 1 : i64, scratch_operands = 6 : i64, tpu.core_type = #tpu.core_type<tc>, window_params = [{transform_indices = @transform_0, window_bounds = array<i64: 8, 32>}, {transform_indices = @transform_1, window_bounds = array<i64: 8, 1>}, {pipeline_mode = #tpu.pipeline_mode<synchronous>, transform_indices = @transform_2, window_bounds = array<i64: 32, 16>}, {pipeline_mode = #tpu.pipeline_mode<synchronous>, transform_indices = @transform_3, window_bounds = array<i64: 8, 16>}, {transform_indices = @transform_4, window_bounds = array<i64: 16, 128>}, {transform_indices = @transform_5, window_bounds = array<i64: 1, 128>}, {transform_indices = @transform_6, window_bounds = array<i64: 8, 128>}]} {
    %c8_i32 = arith.constant 8 : i32
    %0 = arith.muli %arg0, %c8_i32 : i32
    %c0 = arith.constant 0 : index
    %1 = memref.load %arg2[%c0] : memref<1xi32, #tpu.memory_space<smem>>
    %2 = arith.cmpi slt, %0, %1 : i32
    %c0_i32 = arith.constant 0 : i32
    %3 = arith.cmpi eq, %arg1, %c0_i32 : i32
    %c3_i32 = arith.constant 3 : i32
    %4 = arith.cmpi eq, %arg1, %c3_i32 : i32
    %true = arith.constant true
    %5 = arith.xori %2, %true : i1
    %6 = arith.andi %3, %5 : i1
    %7 = arith.extui %6 : i1 to i32
    %c0_i32_0 = arith.constant 0 : i32
    %8 = arith.cmpi ne, %7, %c0_i32_0 : i32
    scf.if %8 {
      %cst = arith.constant 0.000000e+00 : f32
      %17 = vector.broadcast %cst : f32 to vector<8x128xf32>
      %c0_4 = arith.constant 0 : index
      %c0_5 = arith.constant 0 : index
      %18 = vector.load %arg9[%c0_4, %c0_5] : memref<8x128xf32, #tpu.memory_space<vmem>>, vector<8x128xf32>
      tpu.vector_store %arg9[%c0_4, %c0_5], %17 {strides = array<i32>} : memref<8x128xf32, #tpu.memory_space<vmem>>, vector<8x128xf32>,
    } else {
    }
    %9 = arith.andi %2, %3 : i1
    %10 = arith.extui %9 : i1 to i32
    %c0_i32_1 = arith.constant 0 : i32
    %11 = arith.cmpi ne, %10, %c0_i32_1 : i32
    scf.if %11 {
      %c0_4 = arith.constant 0 : index
      %c0_5 = arith.constant 0 : index
      %17 = vector.load %arg6[%c0_4, %c0_5] : memref<8x16xf32, #tpu.memory_space<vmem>>, vector<1x16xf32>
      %c1 = arith.constant 1 : index
      %c0_6 = arith.constant 0 : index
      %18 = vector.load %arg6[%c1, %c0_6] : memref<8x16xf32, #tpu.memory_space<vmem>>, vector<1x16xf32>
      %c2 = arith.constant 2 : index
      %c0_7 = arith.constant 0 : index
      %19 = vector.load %arg6[%c2, %c0_7] : memref<8x16xf32, #tpu.memory_space<vmem>>, vector<1x16xf32>
      %c0_8 = arith.constant 0 : index
      %c0_9 = arith.constant 0 : index
      %20 = vector.load %arg3[%c0_8, %c0_9] : memref<8x32xbf16, #tpu.memory_space<vmem>>, vector<8x32xbf16>
      %c0_10 = arith.constant 0 : index
      %c0_11 = arith.constant 0 : index
      %21 = vector.load %arg5[%c0_10, %c0_11] : memref<32x16xbf16, #tpu.memory_space<vmem>>, vector<32x16xbf16>
      %cst = arith.constant dense<0.000000e+00> : vector<8x16xf32>
      %22 = tpu.matmul %20, %21, %cst {dimension_numbers = #tpu.dot_dimension_numbers<[1], [0], [0], [1], [0, 0, 1, 1], [], []>} : vector<8x32xbf16>, vector<32x16xbf16>, vector<8x16xf32> -> vector<8x16xf32>
      %23 = vector.broadcast %17 : vector<1x16xf32> to vector<8x16xf32>
      %24 = arith.addf %22, %23 : vector<8x16xf32>
      %cst_12 = arith.constant 5.000000e-01 : f32
      %25 = vector.broadcast %cst_12 : f32 to vector<8x16xf32>
      %26 = arith.mulf %25, %24 : vector<8x16xf32>
      %cst_13 = arith.constant 0.707106769 : f32
      %27 = vector.broadcast %cst_13 : f32 to vector<8x16xf32>
      %28 = arith.mulf %24, %27 : vector<8x16xf32>
      %29 = math.erf %28 : vector<8x16xf32>
      %cst_14 = arith.constant 1.000000e+00 : f32
      %30 = vector.broadcast %cst_14 : f32 to vector<8x16xf32>
      %31 = arith.addf %30, %29 : vector<8x16xf32>
      %32 = arith.mulf %26, %31 : vector<8x16xf32>
      %cst_15 = arith.constant dense<0.000000e+00> : vector<8xf32>
      %33 = vector.multi_reduction <add>, %32, %cst_15 [1] : vector<8x16xf32> to vector<8xf32>
      %34 = vector.shape_cast %33 : vector<8xf32> to vector<8x1xf32>
      %cst_16 = arith.constant 1.600000e+01 : f32
      %35 = vector.broadcast %cst_16 : f32 to vector<8x1xf32>
      %36 = arith.divf %34, %35 : vector<8x1xf32>
      %37 = vector.broadcast %36 : vector<8x1xf32> to vector<8x16xf32>
      %38 = arith.subf %32, %37 : vector<8x16xf32>
      %39 = arith.mulf %38, %38 : vector<8x16xf32>
      %cst_17 = arith.constant dense<0.000000e+00> : vector<8xf32>
      %40 = vector.multi_reduction <add>, %39, %cst_17 [1] : vector<8x16xf32> to vector<8xf32>
      %41 = vector.shape_cast %40 : vector<8xf32> to vector<8x1xf32>
      %cst_18 = arith.constant 1.500000e+01 : f32
      %42 = vector.broadcast %cst_18 : f32 to vector<8x1xf32>
      %43 = arith.divf %41, %42 : vector<8x1xf32>
      %44 = math.sqrt %43 : vector<8x1xf32>
      %45 = vector.broadcast %18 : vector<1x16xf32> to vector<8x16xf32>
      %46 = arith.mulf %45, %38 : vector<8x16xf32>
      %cst_19 = arith.constant 9.99999997E-7 : f32
      %47 = vector.broadcast %cst_19 : f32 to vector<8x1xf32>
      %48 = arith.addf %44, %47 : vector<8x1xf32>
      %49 = vector.broadcast %48 : vector<8x1xf32> to vector<8x16xf32>
      %50 = arith.divf %46, %49 : vector<8x16xf32>
      %51 = vector.broadcast %19 : vector<1x16xf32> to vector<8x16xf32>
      %52 = arith.addf %50, %51 : vector<8x16xf32>
      %53 = arith.truncf %52 : vector<8x16xf32> to vector<8x16xbf16>
      %c0_20 = arith.constant 0 : index
      %c0_21 = arith.constant 0 : index
      %54 = vector.load %arg15[%c0_20, %c0_21] : memref<8x16xbf16, #tpu.memory_space<vmem>>, vector<8x16xbf16>
      tpu.vector_store %arg15[%c0_20, %c0_21], %53 {strides = array<i32>} : memref<8x16xbf16, #tpu.memory_space<vmem>>, vector<8x16xbf16>,
      %cst_22 = arith.constant 0xFF800000 : f32
      %55 = vector.broadcast %cst_22 : f32 to vector<8x1xf32>
      %c0_23 = arith.constant 0 : index
      %c0_24 = arith.constant 0 : index
      %56 = vector.load %arg10[%c0_23, %c0_24] : memref<8x1xf32, #tpu.memory_space<vmem>>, vector<8x1xf32>
      tpu.vector_store %arg10[%c0_23, %c0_24], %55 {strides = array<i32>} : memref<8x1xf32, #tpu.memory_space<vmem>>, vector<8x1xf32>,
      %cst_25 = arith.constant 0.000000e+00 : f32
      %57 = vector.broadcast %cst_25 : f32 to vector<8x1xf32>
      %c0_26 = arith.constant 0 : index
      %c0_27 = arith.constant 0 : index
      %58 = vector.load %arg11[%c0_26, %c0_27] : memref<8x1xf32, #tpu.memory_space<vmem>>, vector<8x1xf32>
      tpu.vector_store %arg11[%c0_26, %c0_27], %57 {strides = array<i32>} : memref<8x1xf32, #tpu.memory_space<vmem>>, vector<8x1xf32>,
      %cst_28 = arith.constant 0.000000e+00 : f32
      %59 = vector.broadcast %cst_28 : f32 to vector<8x1xf32>
      %c0_29 = arith.constant 0 : index
      %c0_30 = arith.constant 0 : index
      %60 = vector.load %arg12[%c0_29, %c0_30] : memref<8x1xf32, #tpu.memory_space<vmem>>, vector<8x1xf32>
      tpu.vector_store %arg12[%c0_29, %c0_30], %59 {strides = array<i32>} : memref<8x1xf32, #tpu.memory_space<vmem>>, vector<8x1xf32>,
      %cst_31 = arith.constant 0xFF800000 : f32
      %61 = vector.broadcast %cst_31 : f32 to vector<8x1xf32>
      %c0_32 = arith.constant 0 : index
      %c0_33 = arith.constant 0 : index
      %62 = vector.load %arg13[%c0_32, %c0_33] : memref<8x1xf32, #tpu.memory_space<vmem>>, vector<8x1xf32>
      tpu.vector_store %arg13[%c0_32, %c0_33], %61 {strides = array<i32>} : memref<8x1xf32, #tpu.memory_space<vmem>>, vector<8x1xf32>,
      %c2147483647_i32 = arith.constant 2147483647 : i32
      %63 = vector.broadcast %c2147483647_i32 : i32 to vector<8x1xi32>
      %c0_34 = arith.constant 0 : index
      %c0_35 = arith.constant 0 : index
      %64 = vector.load %arg14[%c0_34, %c0_35] : memref<8x1xi32, #tpu.memory_space<vmem>>, vector<8x1xi32>
      tpu.vector_store %arg14[%c0_34, %c0_35], %63 {strides = array<i32>} : memref<8x1xi32, #tpu.memory_space<vmem>>, vector<8x1xi32>,
    } else {
    }
    %12 = arith.extui %2 : i1 to i32
    %c0_i32_2 = arith.constant 0 : i32
    %13 = arith.cmpi ne, %12, %c0_i32_2 : i32
    scf.if %13 {
      %c0_4 = arith.constant 0 : index
      %c0_5 = arith.constant 0 : index
      %17 = vector.load %arg15[%c0_4, %c0_5] : memref<8x16xbf16, #tpu.memory_space<vmem>>, vector<8x16xbf16>
      %c0_6 = arith.constant 0 : index
      %c0_7 = arith.constant 0 : index
      %18 = vector.load %arg7[%c0_6, %c0_7] : memref<16x128xbf16, #tpu.memory_space<vmem>>, vector<16x128xbf16>
      %cst = arith.constant dense<0.000000e+00> : vector<8x128xf32>
      %19 = tpu.matmul %17, %18, %cst {dimension_numbers = #tpu.dot_dimension_numbers<[1], [0], [0], [1], [0, 0, 1, 1], [], []>} : vector<8x16xbf16>, vector<16x128xbf16>, vector<8x128xf32> -> vector<8x128xf32>
      %c0_8 = arith.constant 0 : index
      %c0_9 = arith.constant 0 : index
      %20 = vector.load %arg8[%c0_8, %c0_9] : memref<1x128xf32, #tpu.memory_space<vmem>>, vector<1x128xf32>
      %21 = vector.broadcast %20 : vector<1x128xf32> to vector<8x128xf32>
      %22 = arith.addf %19, %21 : vector<8x128xf32>
      %cst_10 = arith.constant dense<0xFF800000> : vector<8xf32>
      %23 = vector.multi_reduction <maximumf>, %22, %cst_10 [1] : vector<8x128xf32> to vector<8xf32>
      %24 = vector.shape_cast %23 : vector<8xf32> to vector<8x1xf32>
      %c0_11 = arith.constant 0 : index
      %c0_12 = arith.constant 0 : index
      %25 = vector.load %arg10[%c0_11, %c0_12] : memref<8x1xf32, #tpu.memory_space<vmem>>, vector<8x1xf32>
      %26 = arith.maximumf %25, %24 : vector<8x1xf32>
      %c0_13 = arith.constant 0 : index
      %c0_14 = arith.constant 0 : index
      %27 = vector.load %arg11[%c0_13, %c0_14] : memref<8x1xf32, #tpu.memory_space<vmem>>, vector<8x1xf32>
      %28 = arith.subf %25, %26 : vector<8x1xf32>
      %29 = math.exp %28 : vector<8x1xf32>
      %30 = arith.mulf %27, %29 : vector<8x1xf32>
      %31 = vector.broadcast %26 : vector<8x1xf32> to vector<8x128xf32>
      %32 = arith.subf %22, %31 : vector<8x128xf32>
      %33 = math.exp %32 : vector<8x128xf32>
      %cst_15 = arith.constant dense<0.000000e+00> : vector<8xf32>
      %34 = vector.multi_reduction <add>, %33, %cst_15 [1] : vector<8x128xf32> to vector<8xf32>
      %35 = vector.shape_cast %34 : vector<8xf32> to vector<8x1xf32>
      %36 = arith.addf %30, %35 : vector<8x1xf32>
      %c0_16 = arith.constant 0 : index
      %c0_17 = arith.constant 0 : index
      %37 = vector.load %arg11[%c0_16, %c0_17] : memref<8x1xf32, #tpu.memory_space<vmem>>, vector<8x1xf32>
      tpu.vector_store %arg11[%c0_16, %c0_17], %36 {strides = array<i32>} : memref<8x1xf32, #tpu.memory_space<vmem>>, vector<8x1xf32>,
      %c0_18 = arith.constant 0 : index
      %c0_19 = arith.constant 0 : index
      %38 = vector.load %arg10[%c0_18, %c0_19] : memref<8x1xf32, #tpu.memory_space<vmem>>, vector<8x1xf32>
      tpu.vector_store %arg10[%c0_18, %c0_19], %26 {strides = array<i32>} : memref<8x1xf32, #tpu.memory_space<vmem>>, vector<8x1xf32>,
      %c0_20 = arith.constant 0 : index
      %c0_21 = arith.constant 0 : index
      %39 = vector.load %arg4[%c0_20, %c0_21] : memref<8x1xi32, #tpu.memory_space<vmem>>, vector<8x1xi32>
      %c128_i32 = arith.constant 128 : i32
      %40 = arith.muli %arg1, %c128_i32 : i32
      %41 = tpu.iota {dimensions = array<i32: 1>} : vector<1x128xi32>
      %42 = vector.broadcast %40 : i32 to vector<1x128xi32>
      %43 = arith.addi %42, %41 : vector<1x128xi32>
      %c0_22 = arith.constant 0 : index
      %c0_23 = arith.constant 0 : index
      %44 = vector.load %arg12[%c0_22, %c0_23] : memref<8x1xf32, #tpu.memory_space<vmem>>, vector<8x1xf32>
      %45 = vector.broadcast %43 : vector<1x128xi32> to vector<8x128xi32>
      %46 = vector.broadcast %39 : vector<8x1xi32> to vector<8x128xi32>
      %47 = arith.cmpi eq, %45, %46 : vector<8x128xi32>
      %cst_24 = arith.constant 0.000000e+00 : f32
      %48 = vector.broadcast %cst_24 : f32 to vector<8x128xf32>
      %49 = arith.select %47, %22, %48 : vector<8x128xi1>, vector<8x128xf32>
      %cst_25 = arith.constant dense<0.000000e+00> : vector<8xf32>
      %50 = vector.multi_reduction <add>, %49, %cst_25 [1] : vector<8x128xf32> to vector<8xf32>
      %51 = vector.shape_cast %50 : vector<8xf32> to vector<8x1xf32>
      %52 = arith.addf %44, %51 : vector<8x1xf32>
      %c0_26 = arith.constant 0 : index
      %c0_27 = arith.constant 0 : index
      %53 = vector.load %arg12[%c0_26, %c0_27] : memref<8x1xf32, #tpu.memory_space<vmem>>, vector<8x1xf32>
      tpu.vector_store %arg12[%c0_26, %c0_27], %52 {strides = array<i32>} : memref<8x1xf32, #tpu.memory_space<vmem>>, vector<8x1xf32>,
      %54 = vector.broadcast %24 : vector<8x1xf32> to vector<8x128xf32>
      %55 = arith.cmpf oeq, %22, %54 : vector<8x128xf32>
      %c2147483647_i32 = arith.constant 2147483647 : i32
      %56 = vector.shape_cast %43 : vector<1x128xi32> to vector<1x128xi32>
      %57 = vector.broadcast %56 : vector<1x128xi32> to vector<8x128xi32>
      %58 = vector.broadcast %c2147483647_i32 : i32 to vector<8x128xi32>
      %59 = arith.select %55, %57, %58 : vector<8x128xi1>, vector<8x128xi32>
      %cst_28 = arith.constant dense<2147483647> : vector<8xi32>
      %60 = vector.multi_reduction <minsi>, %59, %cst_28 [1] : vector<8x128xi32> to vector<8xi32>
      %61 = vector.shape_cast %60 : vector<8xi32> to vector<8x1xi32>
      %c0_29 = arith.constant 0 : index
      %c0_30 = arith.constant 0 : index
      %62 = vector.load %arg13[%c0_29, %c0_30] : memref<8x1xf32, #tpu.memory_space<vmem>>, vector<8x1xf32>
      %63 = arith.cmpf ogt, %24, %62 : vector<8x1xf32>
      %c0_31 = arith.constant 0 : index
      %c0_32 = arith.constant 0 : index
      %64 = vector.load %arg14[%c0_31, %c0_32] : memref<8x1xi32, #tpu.memory_space<vmem>>, vector<8x1xi32>
      %65 = arith.select %63, %61, %64 : vector<8x1xi1>, vector<8x1xi32>
      %c0_33 = arith.constant 0 : index
      %c0_34 = arith.constant 0 : index
      %66 = vector.load %arg14[%c0_33, %c0_34] : memref<8x1xi32, #tpu.memory_space<vmem>>, vector<8x1xi32>
      tpu.vector_store %arg14[%c0_33, %c0_34], %65 {strides = array<i32>} : memref<8x1xi32, #tpu.memory_space<vmem>>, vector<8x1xi32>,
      %c0_35 = arith.constant 0 : index
      %c0_36 = arith.constant 0 : index
      %67 = vector.load %arg13[%c0_35, %c0_36] : memref<8x1xf32, #tpu.memory_space<vmem>>, vector<8x1xf32>
      %68 = arith.select %63, %24, %67 : vector<8x1xi1>, vector<8x1xf32>
      %c0_37 = arith.constant 0 : index
      %c0_38 = arith.constant 0 : index
      %69 = vector.load %arg13[%c0_37, %c0_38] : memref<8x1xf32, #tpu.memory_space<vmem>>, vector<8x1xf32>
      tpu.vector_store %arg13[%c0_37, %c0_38], %68 {strides = array<i32>} : memref<8x1xf32, #tpu.memory_space<vmem>>, vector<8x1xf32>,
    } else {
    }
    %14 = arith.andi %2, %4 : i1
    %15 = arith.extui %14 : i1 to i32
    %c0_i32_3 = arith.constant 0 : i32
    %16 = arith.cmpi ne, %15, %c0_i32_3 : i32
    scf.if %16 {
      %c0_4 = arith.constant 0 : index
      %c0_5 = arith.constant 0 : index
      %17 = vector.load %arg10[%c0_4, %c0_5] : memref<8x1xf32, #tpu.memory_space<vmem>>, vector<8x1xf32>
      %c0_6 = arith.constant 0 : index
      %c0_7 = arith.constant 0 : index
      %18 = vector.load %arg11[%c0_6, %c0_7] : memref<8x1xf32, #tpu.memory_space<vmem>>, vector<8x1xf32>
      %19 = math.log %18 : vector<8x1xf32>
      %20 = arith.addf %17, %19 : vector<8x1xf32>
      %c0_8 = arith.constant 0 : index
      %c0_9 = arith.constant 0 : index
      %21 = vector.load %arg12[%c0_8, %c0_9] : memref<8x1xf32, #tpu.memory_space<vmem>>, vector<8x1xf32>
      %22 = arith.subf %21, %20 : vector<8x1xf32>
      %c0_10 = arith.constant 0 : index
      %c0_11 = arith.constant 0 : index
      %23 = vector.load %arg4[%c0_10, %c0_11] : memref<8x1xi32, #tpu.memory_space<vmem>>, vector<8x1xi32>
      %c0_i32_12 = arith.constant 0 : i32
      %24 = vector.broadcast %c0_i32_12 : i32 to vector<8x1xi32>
      %25 = arith.cmpi sgt, %23, %24 : vector<8x1xi32>
      %26 = arith.extui %25 : vector<8x1xi1> to vector<8x1xi32>
      %27 = arith.sitofp %26 : vector<8x1xi32> to vector<8x1xf32>
      %cst = arith.constant 0.000000e+00 : f32
      %28 = vector.broadcast %cst : f32 to vector<8x1xf32>
      %29 = arith.subf %28, %22 : vector<8x1xf32>
      %30 = arith.mulf %29, %27 : vector<8x1xf32>
      %31 = vector.shape_cast %30 : vector<8x1xf32> to vector<1x8x1xf32>
      %cst_13 = arith.constant dense<0.000000e+00> : vector<1xf32>
      %32 = vector.multi_reduction <add>, %31, %cst_13 [1, 2] : vector<1x8x1xf32> to vector<1xf32>
      %33 = vector.shape_cast %32 : vector<1xf32> to vector<1x1x1xf32>
      %34 = vector.extract %33[0, 0, 0] : f32 from vector<1x1x1xf32>
      %35 = vector.shape_cast %27 : vector<8x1xf32> to vector<1x8x1xf32>
      %cst_14 = arith.constant dense<0.000000e+00> : vector<1xf32>
      %36 = vector.multi_reduction <add>, %35, %cst_14 [1, 2] : vector<1x8x1xf32> to vector<1xf32>
      %37 = vector.shape_cast %36 : vector<1xf32> to vector<1x1x1xf32>
      %38 = vector.extract %37[0, 0, 0] : f32 from vector<1x1x1xf32>
      %c0_15 = arith.constant 0 : index
      %c0_16 = arith.constant 0 : index
      %39 = vector.load %arg14[%c0_15, %c0_16] : memref<8x1xi32, #tpu.memory_space<vmem>>, vector<8x1xi32>
      %40 = arith.cmpi eq, %39, %23 : vector<8x1xi32>
      %41 = arith.andi %25, %40 : vector<8x1xi1>
      %cst_17 = arith.constant 1.000000e+00 : f32
      %cst_18 = arith.constant 0.000000e+00 : f32
      %42 = vector.broadcast %cst_17 : f32 to vector<8x1xf32>
      %43 = vector.broadcast %cst_18 : f32 to vector<8x1xf32>
      %44 = arith.select %41, %42, %43 : vector<8x1xi1>, vector<8x1xf32>
      %45 = vector.shape_cast %44 : vector<8x1xf32> to vector<1x8x1xf32>
      %cst_19 = arith.constant dense<0.000000e+00> : vector<1xf32>
      %46 = vector.multi_reduction <add>, %45, %cst_19 [1, 2] : vector<1x8x1xf32> to vector<1xf32>
      %47 = vector.shape_cast %46 : vector<1xf32> to vector<1x1x1xf32>
      %48 = vector.extract %47[0, 0, 0] : f32 from vector<1x1x1xf32>
      %49 = tpu.iota {dimensions = array<i32: 1>} : vector<8x128xi32>
      %50 = tpu.iota {dimensions = array<i32: 0>} : vector<8x128xi32>
      %c0_i32_20 = arith.constant 0 : i32
      %51 = vector.broadcast %c0_i32_20 : i32 to vector<8x128xi32>
      %52 = arith.cmpi eq, %49, %51 : vector<8x128xi32>
      %c1_i32 = arith.constant 1 : i32
      %53 = vector.broadcast %c1_i32 : i32 to vector<8x128xi32>
      %54 = arith.cmpi eq, %49, %53 : vector<8x128xi32>
      %c2_i32 = arith.constant 2 : i32
      %55 = vector.broadcast %c2_i32 : i32 to vector<8x128xi32>
      %56 = arith.cmpi eq, %49, %55 : vector<8x128xi32>
      %cst_21 = arith.constant 0.000000e+00 : f32
      %57 = vector.broadcast %48 : f32 to vector<8x128xf32>
      %58 = vector.broadcast %cst_21 : f32 to vector<8x128xf32>
      %59 = arith.select %56, %57, %58 : vector<8x128xi1>, vector<8x128xf32>
      %60 = vector.broadcast %38 : f32 to vector<8x128xf32>
      %61 = arith.select %54, %60, %59 : vector<8x128xi1>, vector<8x128xf32>
      %62 = vector.broadcast %34 : f32 to vector<8x128xf32>
      %63 = arith.select %52, %62, %61 : vector<8x128xi1>, vector<8x128xf32>
      %c0_i32_22 = arith.constant 0 : i32
      %64 = vector.broadcast %c0_i32_22 : i32 to vector<8x128xi32>
      %65 = arith.cmpi eq, %50, %64 : vector<8x128xi32>
      %cst_23 = arith.constant 0.000000e+00 : f32
      %66 = vector.broadcast %cst_23 : f32 to vector<8x128xf32>
      %67 = arith.select %65, %63, %66 : vector<8x128xi1>, vector<8x128xf32>
      %c0_24 = arith.constant 0 : index
      %c0_25 = arith.constant 0 : index
      %68 = vector.load %arg9[%c0_24, %c0_25] : memref<8x128xf32, #tpu.memory_space<vmem>>, vector<8x128xf32>
      tpu.vector_store %arg9[%c0_24, %c0_25], %67 {strides = array<i32>} : memref<8x128xf32, #tpu.memory_space<vmem>>, vector<8x128xf32>,
    } else {
    }
    return
  }
  func.func @transform_0(%arg0: i32, %arg1: i32, %arg2: memref<1xi32, #tpu.memory_space<smem>>) -> (i32, i32) {
    %c0_i32 = arith.constant 0 : i32
    %c0_i32_0 = arith.constant 0 : i32
    return %arg0, %c0_i32 : i32, i32
  }
  func.func @transform_1(%arg0: i32, %arg1: i32, %arg2: memref<1xi32, #tpu.memory_space<smem>>) -> (i32, i32) {
    %c0_i32 = arith.constant 0 : i32
    %c0_i32_0 = arith.constant 0 : i32
    return %arg0, %c0_i32 : i32, i32
  }
  func.func @transform_2(%arg0: i32, %arg1: i32, %arg2: memref<1xi32, #tpu.memory_space<smem>>) -> (i32, i32) {
    %c0_i32 = arith.constant 0 : i32
    %c0_i32_0 = arith.constant 0 : i32
    %c0_i32_1 = arith.constant 0 : i32
    return %c0_i32, %c0_i32_0 : i32, i32
  }
  func.func @transform_3(%arg0: i32, %arg1: i32, %arg2: memref<1xi32, #tpu.memory_space<smem>>) -> (i32, i32) {
    %c0_i32 = arith.constant 0 : i32
    %c0_i32_0 = arith.constant 0 : i32
    %c0_i32_1 = arith.constant 0 : i32
    return %c0_i32, %c0_i32_0 : i32, i32
  }
  func.func @transform_4(%arg0: i32, %arg1: i32, %arg2: memref<1xi32, #tpu.memory_space<smem>>) -> (i32, i32) {
    %c0_i32 = arith.constant 0 : i32
    %c0_i32_0 = arith.constant 0 : i32
    return %c0_i32, %arg1 : i32, i32
  }
  func.func @transform_5(%arg0: i32, %arg1: i32, %arg2: memref<1xi32, #tpu.memory_space<smem>>) -> (i32, i32) {
    %c0_i32 = arith.constant 0 : i32
    %c0_i32_0 = arith.constant 0 : i32
    return %c0_i32, %arg1 : i32, i32
  }
  func.func @transform_6(%arg0: i32, %arg1: i32, %arg2: memref<1xi32, #tpu.memory_space<smem>>) -> (i32, i32) {
    %c0_i32 = arith.constant 0 : i32
    %c0_i32_0 = arith.constant 0 : i32
    return %arg0, %c0_i32 : i32, i32
  }
}

</mosaic_0001>

<llo_original>
// kernel: tpu_custom_call.1
$region0: #{tpu_custom_call.1}
  #allocation0 [shape = 'u32[]', space=smem, size = 0x4, offset = 0x4, fixed_abs, tag = 'smem constant byte address 0x4 - core index']
  #allocation1 [shape = 'u32[144,128]{1,0:T(1,128)}', space=vmem, size = 0x12000, scoped, tag = 'internal scratch']
  #allocation2 [shape = 'f32[8,1]{1,0:T(8,128)}', space=vmem, size = 0x1000, scoped, tag = 'scratch operand']
  #allocation3 [shape = 'f32[8,1]{1,0:T(8,128)}', space=vmem, size = 0x1000, scoped, tag = 'scratch operand']
  #allocation4 [shape = 'f32[8,1]{1,0:T(8,128)}', space=vmem, size = 0x1000, scoped, tag = 'scratch operand']
  #allocation5 [shape = 'f32[8,1]{1,0:T(8,128)}', space=vmem, size = 0x1000, scoped, tag = 'scratch operand']
  #allocation6 [shape = 's32[8,1]{1,0:T(8,128)}', space=vmem, size = 0x1000, scoped, tag = 'scratch operand']
  #allocation7 [shape = 'bf16[8,16]{1,0:T(8,128)(2,1)}', space=vmem, size = 0x800, scoped, tag = 'scratch operand']
  #allocation8 [shape = 's32[1]{0}', space=sflag, size = 0x4, scoped, tag = 'scoped memory for tpu_custom_call.1']
  #allocation9 [shape = 's32[1]{0:T(128)S(6)}', space=smem, size = 0x200, scoped, tag = 'prefetched SMEM operand 0']
  %s0 = inlined_call_operand.<no memory space> [shape: s32[1], index: 0, kind: input, shape index: {}]
  %s1 = inlined_call_operand.vmem [shape: bf16[8,32], index: 1, kind: input, shape index: {}]
  %s2 = inlined_call_operand.vmem [shape: s32[8,1], index: 2, kind: input, shape index: {}]
  %s3 = inlined_call_operand.vmem [shape: bf16[32,16], index: 3, kind: input, shape index: {}]
  %s4 = inlined_call_operand.vmem [shape: f32[8,16], index: 4, kind: input, shape index: {}]
  %s5 = inlined_call_operand.vmem [shape: bf16[16,512], index: 5, kind: input, shape index: {}]
  %s6 = inlined_call_operand.vmem [shape: f32[1,512], index: 6, kind: input, shape index: {}]
  %s7 = inlined_call_operand.hbm [shape: f32[8,128], index: 7, kind: output, shape index: {}]
  %s8 = sld [smem:[#allocation0]]
  $region114: #{tpu_custom_call.1} parent=0
    _
  %s10 = ssub.s32 1, %s8
  %s11 = scalar_select 0, %s10, %s8
  %12 = sst [smem:[#allocation9]] %s0
  $region1: #{tpu_custom_call.1} parent=0
    #allocation10 [shape = 'u8[8192]{0}', space=vmem, size = 0x2000, scoped, tag = 'input window, operand 5']
    #allocation11 [shape = 'u8[4096]{0}', space=vmem, size = 0x1000, scoped, tag = 'output window, operand 0, single buffered']
    #allocation12 [shape = 's32[2]{0}', space=sflag, size = 0x8, scoped, tag = 'scoped memory for tpu_custom_call.1']
    %13 = vsyncpa [#allocation12], 0
    loop: start=0, step=1, limit=6
    $region2: #{tpu_custom_call.1} parent=1 // loop_pre_header
      _
    $region3: #{tpu_custom_call.1} parent=1 // loop_header
      %s15 = sphi 0, %s19
      %p16 = scmp.ge.s32.totalorder %s15, 6
      %s22 = sphi 0, %s34
      %s23 = sphi 0, %s30
      %s24 = sphi 0, %s22
      %s25 = sphi 0, %s23
      %s26 = sphi 0, %s24
      %s27 = sphi 0, %s25
      %s37 = sphi 0, %s39
      %s40 = sphi 0, %s37
      %s41 = sphi 0, %s40
      %s57 = sphi 0, %s41
      %s63 = sphi 0, %s65
      %s66 = sphi 0, %s63
      %s67 = sphi 0, %s66
      %s83 = sphi 0, %s67
      %s87 = sphi 0, %s87
      %s89 = sphi 0, %s87
      %s90 = sphi 0, %s89
      %s104 = sphi 0, %s90
      %s108 = sphi 0, %s108
      %s110 = sphi 0, %s108
      %s111 = sphi 0, %s110
      %s125 = sphi 0, %s111
      %s131 = sphi 0, %s133
      %s134 = sphi 0, %s131
      %s135 = sphi 0, %s134
      %s151 = sphi 0, %s135
      %s157 = sphi 0, %s159
      %s160 = sphi 0, %s157
      %s161 = sphi 0, %s160
      %s177 = sphi 0, %s161
      %s183 = sphi 0, %s185
      %s186 = sphi 0, %s183
      %s187 = sphi 0, %s186
      %s203 = sphi 0, %s187
    $region4: #{tpu_custom_call.1} parent=1 // loop_header_branch
      %18 = sbr.rel (%p16) target = $region8
    $region5: #{tpu_custom_call.1} parent=1 // loop_body
      %s20 = ssub.s32 %s15, 1
      %s21 = ssub.s32 %s15, 2
      %s28 = sadd.s32 1, %s23
      %p29 = scmp.ge.s32.totalorder %s28, 4
      %s30 = scalar_select %p29, 0, %s28
      %s31 = sadd.s32 1, %s22
      %s32 = scalar_select %p29, %s31, %s22
      %p33 = scmp.ge.s32.totalorder %s32, 1
      %s34 = scalar_select %p33, 0, %s32
      %s35 = ssub.s32 %s22, %s34
      %p36 = scmp.eq.s32.totalorder %s35, 0
      %s38 = sadd.s32 %s37, 1
      %s39 = scalar_select %p36, %s37, %s38
      %p42 = pneg %p36
      %p43 = scmp.eq.s32.totalorder %s15, 3
      %p44 = por %p42, %p43
      %p45 = scmp.ne.s32.totalorder %s37, %s40
      %p46 = scmp.eq.s32.totalorder %s15, 0
      %p47 = por %p45, %p46
      %p48 = scmp.ne.s32.totalorder %s37, %s40
      %p49 = scmp.eq.s32.totalorder %s20, 3
      %p50 = por %p48, %p49
      %p51 = scmp.ne.s32.totalorder %s40, %s41
      %p52 = scmp.eq.s32.totalorder %s20, 0
      %p53 = por %p51, %p52
      %p54 = scmp.ne.s32.totalorder %s40, %s41
      %p55 = scmp.eq.s32.totalorder %s21, 3
      %p56 = por %p54, %p55
      %p58 = scmp.ne.s32.totalorder %s41, %s57
      %p59 = scmp.eq.s32.totalorder %s21, 0
      %p60 = por %p58, %p59
      %s61 = ssub.s32 %s22, %s34
      %p62 = scmp.eq.s32.totalorder %s61, 0
      %s64 = sadd.s32 %s63, 1
      %s65 = scalar_select %p62, %s63, %s64
      %p68 = pneg %p62
      %p69 = scmp.eq.s32.totalorder %s15, 3
      %p70 = por %p68, %p69
      %p71 = scmp.ne.s32.totalorder %s63, %s66
      %p72 = scmp.eq.s32.totalorder %s15, 0
      %p73 = por %p71, %p72
      %p74 = scmp.ne.s32.totalorder %s63, %s66
      %p75 = scmp.eq.s32.totalorder %s20, 3
      %p76 = por %p74, %p75
      %p77 = scmp.ne.s32.totalorder %s66, %s67
      %p78 = scmp.eq.s32.totalorder %s20, 0
      %p79 = por %p77, %p78
      %p80 = scmp.ne.s32.totalorder %s66, %s67
      %p81 = scmp.eq.s32.totalorder %s21, 3
      %p82 = por %p80, %p81
      %p84 = scmp.ne.s32.totalorder %s67, %s83
      %p85 = scmp.eq.s32.totalorder %s21, 0
      %p86 = por %p84, %p85
      %s88 = sadd.s32 %s87, 1
      %p91 = scmp.eq.s32.totalorder %s15, 3
      %p92 = scmp.ne.s32.totalorder %s87, %s89
      %p93 = scmp.eq.s32.totalorder %s15, 0
      %p94 = por %p92, %p93
      %p95 = scmp.ne.s32.totalorder %s87, %s89
      %p96 = scmp.eq.s32.totalorder %s20, 3
      %p97 = por %p95, %p96
      %p98 = scmp.ne.s32.totalorder %s89, %s90
      %p99 = scmp.eq.s32.totalorder %s20, 0
      %p100 = por %p98, %p99
      %p101 = scmp.ne.s32.totalorder %s89, %s90
      %p102 = scmp.eq.s32.totalorder %s21, 3
      %p103 = por %p101, %p102
      %p105 = scmp.ne.s32.totalorder %s90, %s104
      %p106 = scmp.eq.s32.totalorder %s21, 0
      %p107 = por %p105, %p106
      %s109 = sadd.s32 %s108, 1
      %p112 = scmp.eq.s32.totalorder %s15, 3
      %p113 = scmp.ne.s32.totalorder %s108, %s110
      %p114 = scmp.eq.s32.totalorder %s15, 0
      %p115 = por %p113, %p114
      %p116 = scmp.ne.s32.totalorder %s108, %s110
      %p117 = scmp.eq.s32.totalorder %s20, 3
      %p118 = por %p116, %p117
      %p119 = scmp.ne.s32.totalorder %s110, %s111
      %p120 = scmp.eq.s32.totalorder %s20, 0
      %p121 = por %p119, %p120
      %p122 = scmp.ne.s32.totalorder %s110, %s111
      %p123 = scmp.eq.s32.totalorder %s21, 3
      %p124 = por %p122, %p123
      %p126 = scmp.ne.s32.totalorder %s111, %s125
      %p127 = scmp.eq.s32.totalorder %s21, 0
      %p128 = por %p126, %p127
      %s129 = ssub.s32 %s23, %s30
      %p130 = scmp.eq.s32.totalorder %s129, 0
      %s132 = sadd.s32 %s131, 1
      %s133 = scalar_select %p130, %s131, %s132
      %p136 = pneg %p130
      %p137 = scmp.eq.s32.totalorder %s15, 3
      %p138 = por %p136, %p137
      %p139 = scmp.ne.s32.totalorder %s131, %s134
      %p140 = scmp.eq.s32.totalorder %s15, 0
      %p141 = por %p139, %p140
      %p142 = scmp.ne.s32.totalorder %s131, %s134
      %p143 = scmp.eq.s32.totalorder %s20, 3
      %p144 = por %p142, %p143
      %p145 = scmp.ne.s32.totalorder %s134, %s135
      %p146 = scmp.eq.s32.totalorder %s20, 0
      %p147 = por %p145, %p146
      %p148 = scmp.ne.s32.totalorder %s134, %s135
      %p149 = scmp.eq.s32.totalorder %s21, 3
      %p150 = por %p148, %p149
      %p152 = scmp.ne.s32.totalorder %s135, %s151
      %p153 = scmp.eq.s32.totalorder %s21, 0
      %p154 = por %p152, %p153
      %s155 = ssub.s32 %s23, %s30
      %p156 = scmp.eq.s32.totalorder %s155, 0
      %s158 = sadd.s32 %s157, 1
      %s159 = scalar_select %p156, %s157, %s158
      %p162 = pneg %p156
      %p163 = scmp.eq.s32.totalorder %s15, 3
      %p164 = por %p162, %p163
      %p165 = scmp.ne.s32.totalorder %s157, %s160
      %p166 = scmp.eq.s32.totalorder %s15, 0
      %p167 = por %p165, %p166
      %p168 = scmp.ne.s32.totalorder %s157, %s160
      %p169 = scmp.eq.s32.totalorder %s20, 3
      %p170 = por %p168, %p169
      %p171 = scmp.ne.s32.totalorder %s160, %s161
      %p172 = scmp.eq.s32.totalorder %s20, 0
      %p173 = por %p171, %p172
      %p174 = scmp.ne.s32.totalorder %s160, %s161
      %p175 = scmp.eq.s32.totalorder %s21, 3
      %p176 = por %p174, %p175
      %p178 = scmp.ne.s32.totalorder %s161, %s177
      %p179 = scmp.eq.s32.totalorder %s21, 0
      %p180 = por %p178, %p179
      %s181 = ssub.s32 %s22, %s34
      %p182 = scmp.eq.s32.totalorder %s181, 0
      %s184 = sadd.s32 %s183, 1
      %s185 = scalar_select %p182, %s183, %s184
      %p188 = pneg %p182
      %p189 = scmp.eq.s32.totalorder %s15, 3
      %p190 = por %p188, %p189
      %p191 = scmp.ne.s32.totalorder %s183, %s186
      %p192 = scmp.eq.s32.totalorder %s15, 0
      %p193 = por %p191, %p192
      %p194 = scmp.ne.s32.totalorder %s183, %s186
      %p195 = scmp.eq.s32.totalorder %s20, 3
      %p196 = por %p194, %p195
      %p197 = scmp.ne.s32.totalorder %s186, %s187
      %p198 = scmp.eq.s32.totalorder %s20, 0
      %p199 = por %p197, %p198
      %p200 = scmp.ne.s32.totalorder %s186, %s187
      %p201 = scmp.eq.s32.totalorder %s21, 3
      %p202 = por %p200, %p201
      %p204 = scmp.ne.s32.totalorder %s187, %s203
      %p205 = scmp.eq.s32.totalorder %s21, 0
      %p206 = por %p204, %p205
      %p207 = scmp.le.s32.totalorder 1, %s15
      %p208 = scmp.lt.s32.totalorder %s15, 5
      %p209 = pnand %p207, %p208
      %p210 = pneg %p209
      // Predicated region
      $region9: #{tpu_custom_call.1} parent=5 // pred_check
        _
      $region10: #{tpu_custom_call.1} parent=5 // pred_check_branch
        %212 = sbr.rel (%p209) target = $region12
      $region11: #{tpu_custom_call.1} parent=5 // pred_region
        %s213 = ssub.s32 %s15, 1
        // Predicated region
        $region13: #{tpu_custom_call.1} parent=11 // pred_check
          %p214 = pneg %p53
        $region14: #{tpu_custom_call.1} parent=11 // pred_check_branch
          %216 = sbr.rel (%p214) target = $region16
        $region15: #{tpu_custom_call.1} parent=11 // pred_region
          %p217 = scmp.lt.s32.totalorder %s24, 0
          %s218 = scalar_select %p217, %s24, 0
          %s219 = smul.addr %s218, 4
          %s220 = scalar_lea.vmem %s1, %s219
        $region16: #{tpu_custom_call.1} parent=11 // pred_fallthru
          _
        // Predicated region
        $region17: #{tpu_custom_call.1} parent=11 // pred_check
          %p221 = pneg %p79
        $region18: #{tpu_custom_call.1} parent=11 // pred_check_branch
          %223 = sbr.rel (%p221) target = $region20
        $region19: #{tpu_custom_call.1} parent=11 // pred_region
          %p224 = scmp.lt.s32.totalorder %s24, 0
          %s225 = scalar_select %p224, %s24, 0
          %s226 = smul.addr %s225, 8
          %s227 = scalar_lea.vmem %s2, %s226
        $region20: #{tpu_custom_call.1} parent=11 // pred_fallthru
          _
        // Predicated region
        $region21: #{tpu_custom_call.1} parent=11 // pred_check
          %p228 = pneg %p100
        $region22: #{tpu_custom_call.1} parent=11 // pred_check_branch
          %230 = sbr.rel (%p228) target = $region24
        $region23: #{tpu_custom_call.1} parent=11 // pred_region
          _
        $region24: #{tpu_custom_call.1} parent=11 // pred_fallthru
          _
        // Predicated region
        $region25: #{tpu_custom_call.1} parent=11 // pred_check
          %p231 = pneg %p121
        $region26: #{tpu_custom_call.1} parent=11 // pred_check_branch
          %233 = sbr.rel (%p231) target = $region28
        $region27: #{tpu_custom_call.1} parent=11 // pred_region
          _
        $region28: #{tpu_custom_call.1} parent=11 // pred_fallthru
          _
      $region12: #{tpu_custom_call.1} parent=5 // pred_fallthru
        _
      %p234 = scmp.lt.s32.totalorder %s15, 4
      // Predicated region
      $region29: #{tpu_custom_call.1} parent=5 // pred_check
        %p235 = pneg %p234
      $region30: #{tpu_custom_call.1} parent=5 // pred_check_branch
        %237 = sbr.rel (%p235) target = $region32
      $region31: #{tpu_custom_call.1} parent=5 // pred_region
        // Predicated region
        $region33: #{tpu_custom_call.1} parent=31 // pred_check
          %p238 = pneg %p141
        $region34: #{tpu_custom_call.1} parent=31 // pred_check_branch
          %240 = sbr.rel (%p238) target = $region36
        $region35: #{tpu_custom_call.1} parent=31 // pred_region
          %s241 = sand.u32 %s131, 1
          %s242 = sand.u32 %s131, 1
          %s243 = smul.addr %s242, 8
          %s244 = scalar_lea.vmem [#allocation10], %s243
          %s245 = smul.addr %s23, 4
          %s246 = scalar_lea.vmem %s5, %s245
          // Predicated region
          $region37: #{tpu_custom_call.1} parent=35 // pred_check
            _
          $region38: #{tpu_custom_call.1} parent=35 // pred_check_branch
            %248 = sbr.rel (0) target = $region40
          $region39: #{tpu_custom_call.1} parent=35 // pred_region
            // Predicated region
            $region41: #{tpu_custom_call.1} parent=39 // pred_check
              _
            $region42: #{tpu_custom_call.1} parent=39 // pred_check_branch
              %250 = sbr.rel target = $region44
            $region43: #{tpu_custom_call.1} parent=39 // pred_region
              // Predicated region
              $region56: #{tpu_custom_call.1} parent=43 // pred_check
                _
              $region57: #{tpu_custom_call.1} parent=43 // pred_check_branch
                %267 = sbr.rel (0) target = $region59
              $region58: #{tpu_custom_call.1} parent=43 // pred_region
                loop: start=0, step=1, limit=1
                $region60: #{tpu_custom_call.1} parent=58 // loop_pre_header
                  _
                $region61: #{tpu_custom_call.1} parent=58 // loop_header
                  %s269 = sphi 0, %s273
                  %p270 = scmp.ge.s32.totalorder %s269, 1
                  %s274 = sphi %s246, %s246
                  %s275 = sphi %s244, %s244
                $region62: #{tpu_custom_call.1} parent=58 // loop_header_branch
                  %272 = sbr.rel (%p270) target = $region66
                $region63: #{tpu_custom_call.1} parent=58 // loop_body
                  _
                $region64: #{tpu_custom_call.1} parent=58 // loop_footer
                  %s273 = sadd.s32 1, %s269
                $region65: #{tpu_custom_call.1} parent=58 // loop_footer_branch
                  %268 = sbr.rel target = $region61
                $region66: #{tpu_custom_call.1} parent=58 // loop_exit
                  _
                loop: start=0, step=1, limit=1
                $region67: #{tpu_custom_call.1} parent=58 // loop_pre_header
                  _
                $region68: #{tpu_custom_call.1} parent=58 // loop_header
                  %s278 = sphi 0, %s282
                  %p279 = scmp.ge.s32.totalorder %s278, 1
                  %s283 = sphi %s246, %s246
                  %s284 = sphi %s244, %s244
                $region69: #{tpu_custom_call.1} parent=58 // loop_header_branch
                  %281 = sbr.rel (%p279) target = $region73
                $region70: #{tpu_custom_call.1} parent=58 // loop_body
                  %v285 = vld [vmem:[%s283] sm:$0xf]
                  %286 = vst [vmem:[%s284] sm:$0xf] %v285
                  %v287 = vld [vmem:[%s283 + $0x10] sm:$0xf]
                  %288 = vst [vmem:[%s284 + $0x4] sm:$0xf] %v287
                $region71: #{tpu_custom_call.1} parent=58 // loop_footer
                  %s282 = sadd.s32 1, %s278
                $region72: #{tpu_custom_call.1} parent=58 // loop_footer_branch
                  %277 = sbr.rel target = $region68
                $region73: #{tpu_custom_call.1} parent=58 // loop_exit
                  _
              $region59: #{tpu_custom_call.1} parent=43 // pred_fallthru
                _
            $region44: #{tpu_custom_call.1} parent=39 // pred_fallthru
              _
            // Predicated region
            $region45: #{tpu_custom_call.1} parent=39 // pred_check
              _
            $region46: #{tpu_custom_call.1} parent=39 // pred_check_branch
              %252 = sbr.rel (0) target = $region48
            $region47: #{tpu_custom_call.1} parent=39 // pred_region
              loop: start=0, step=1, limit=1
              $region49: #{tpu_custom_call.1} parent=47 // loop_pre_header
                _
              $region50: #{tpu_custom_call.1} parent=47 // loop_header
                %s255 = sphi 0, %s259
                %p256 = scmp.ge.s32.totalorder %s255, 1
                %s260 = sphi %s246, %s246
                %s261 = sphi %s244, %s244
              $region51: #{tpu_custom_call.1} parent=47 // loop_header_branch
                %258 = sbr.rel (%p256) target = $region55
              $region52: #{tpu_custom_call.1} parent=47 // loop_body
                %v262 = vld [vmem:[%s260] sm:$0xf]
                %263 = vst [vmem:[%s261] sm:$0xf] %v262
                %v264 = vld [vmem:[%s260 + $0x10] sm:$0xf]
                %265 = vst [vmem:[%s261 + $0x4] sm:$0xf] %v264
              $region53: #{tpu_custom_call.1} parent=47 // loop_footer
                %s259 = sadd.s32 1, %s255
              $region54: #{tpu_custom_call.1} parent=47 // loop_footer_branch
                %254 = sbr.rel target = $region50
              $region55: #{tpu_custom_call.1} parent=47 // loop_exit
                _
            $region48: #{tpu_custom_call.1} parent=39 // pred_fallthru
              _
          $region40: #{tpu_custom_call.1} parent=35 // pred_fallthru
            _
          %289 = vnop
        $region36: #{tpu_custom_call.1} parent=31 // pred_fallthru
          _
        // Predicated region
        $region74: #{tpu_custom_call.1} parent=31 // pred_check
          %p290 = pneg %p167
        $region75: #{tpu_custom_call.1} parent=31 // pred_check_branch
          %292 = sbr.rel (%p290) target = $region77
        $region76: #{tpu_custom_call.1} parent=31 // pred_region
          %p293 = scmp.lt.s32.totalorder %s23, 3
          %s294 = scalar_select %p293, %s23, 3
          %s295 = scalar_lea.vmem %s6, %s294
        $region77: #{tpu_custom_call.1} parent=31 // pred_fallthru
          _
      $region32: #{tpu_custom_call.1} parent=5 // pred_fallthru
        _
      %p296 = scmp.le.s32.totalorder 1, %s15
      %p297 = scmp.lt.s32.totalorder %s15, 5
      %p298 = pnand %p296, %p297
      %p299 = pneg %p298
      // Predicated region
      $region78: #{tpu_custom_call.1} parent=5 // pred_check
        _
      $region79: #{tpu_custom_call.1} parent=5 // pred_check_branch
        %301 = sbr.rel (%p298) target = $region81
      $region80: #{tpu_custom_call.1} parent=5 // pred_region
        %s302 = ssub.s32 %s15, 1
        %s303 = sand.u32 %s134, 1
        %s304 = sand.u32 %s134, 1
        %s305 = smul.addr %s304, 8
        %s306 = scalar_lea.vmem [#allocation10], %s305
        // Predicated region
        $region82: #{tpu_custom_call.1} parent=80 // pred_check
          %p307 = pneg %p147
        $region83: #{tpu_custom_call.1} parent=80 // pred_check_branch
          %309 = sbr.rel (%p307) target = $region85
        $region84: #{tpu_custom_call.1} parent=80 // pred_region
          _
        $region85: #{tpu_custom_call.1} parent=80 // pred_fallthru
          _
        %p310 = scmp.lt.s32.totalorder %s24, 0
        %s311 = scalar_select %p310, %s24, 0
        %s312 = smul.addr %s311, 4
        %s313 = scalar_lea.vmem %s1, %s312
        %p314 = pneg %p53
        %p315 = pneg %p50
        %p316 = scmp.lt.s32.totalorder %s24, 0
        %s317 = scalar_select %p316, %s24, 0
        %s318 = smul.addr %s317, 8
        %s319 = scalar_lea.vmem %s2, %s318
        %p320 = pneg %p79
        %p321 = pneg %p76
        %p322 = pneg %p100
        %p323 = pneg %p97
        %p324 = pneg %p121
        %p325 = pneg %p118
        %s326 = sand.u32 %s134, 1
        %s327 = sand.u32 %s134, 1
        %s328 = smul.addr %s327, 8
        %s329 = scalar_lea.vmem [#allocation10], %s328
        %p330 = pneg %p147
        %p331 = pneg %p144
        %p332 = scmp.lt.s32.totalorder %s25, 3
        %s333 = scalar_select %p332, %s25, 3
        %s334 = scalar_lea.vmem %s6, %s333
        %p335 = pneg %p173
        %p336 = pneg %p170
        %p337 = pneg %p199
        %p338 = pneg %p196
        %p339 = scmp.lt.s32.totalorder %s24, 0
        %s340 = scalar_select %p339, %s24, 0
        %s341 = smul.addr %s340, 4
        %s342 = scalar_lea.vmem %s1, %s341
        %p343 = scmp.lt.s32.totalorder %s24, 0
        %s344 = scalar_select %p343, %s24, 0
        %s345 = smul.addr %s344, 8
        %s346 = scalar_lea.vmem %s2, %s345
        %p347 = scmp.lt.s32.totalorder %s25, 3
        %s348 = scalar_select %p347, %s25, 3
        %s349 = scalar_lea.vmem %s6, %s348
        %s351 = smul.u32 %s24, 8
        %s352 = sld [smem:[#allocation9]]
        %p353 = scmp.lt.s32.totalorder %s351, %s352
        %p354 = scmp.eq.s32.totalorder %s25, 0
        %p355 = scmp.eq.s32.totalorder %s25, 3
        %p356 = scmp.ge.s32.totalorder %s351, %s352
        %p357 = pnand %p354, %p356
        %p358 = pneg %p357
        // Predicated region
        $region86: #{tpu_custom_call.1} parent=80 // pred_check
          _
        $region87: #{tpu_custom_call.1} parent=80 // pred_check_branch
          %360 = sbr.rel (%p357) target = $region89
        $region88: #{tpu_custom_call.1} parent=80 // pred_region
          %361 = vst [vmem:[#allocation11] sm:$0xff] 0.0
        $region89: #{tpu_custom_call.1} parent=80 // pred_fallthru
          _
        %p362 = pnand %p353, %p354
        %p363 = pneg %p362
        // Predicated region
        $region90: #{tpu_custom_call.1} parent=80 // pred_check
          _
        $region91: #{tpu_custom_call.1} parent=80 // pred_check_branch
          %365 = sbr.rel (%p362) target = $region93
        $region92: #{tpu_custom_call.1} parent=80 // pred_region
          %v366 = vld [vmem:[%s4] sm:$0x1]
          %v367 = vld [vmem:[%s4 + $0x1] sm:$0x1]
          %v368 = vld [vmem:[%s4 + $0x2] sm:$0x1]
          %v369 = vld [vmem:[%s342] sm:$0xf]
          %v370 = vld [vmem:[%s3] sm:$0xf]
          %v371 = vld [vmem:[%s3 + $0x4] sm:$0xf]
          %v372 = vld [vmem:[%s3 + $0x8] sm:$0xf]
          %v373 = vld [vmem:[%s3 + $0xc] sm:$0xf]
          %v374 = vlaneseq
          %v375 = vshrl.u32 %v374, 7
          %v376 = vsub.s32 0, %v375
          %v377 = vrot.slane %v366, %v376
          %v382 = vunpack.c.l.b16 %v370
          %v383 = vunpack.c.l.b16 %v371
          %v384 = vunpack.c.l.b16 %v372
          %v385 = vunpack.c.l.b16 %v373
          %v386 = vpack.c.b16 %v383, %v382
          %v387 = vpack.c.b16 %v385, %v384
          %vm390 = vcmask 261120
          %v392 = vsel %vm390, %v369, 0
          %394 = vmatprep.subr.bf16.mxu0 0
          %395 = vmatpush1.bf16.msra.mxu0 %v386
          %396 = vmatprep.subr.bf16.mxu0 0
          %397 = vmatpush1.bf16.msra.mxu0 %v387
          %398 = vmatprep.subr.bf16.mxu0 0
          %399 = vmatpush1.bf16.msra.mxu0 0
          %400 = vmatprep.subr.bf16.mxu0 0
          %401 = vmatpush1.bf16.msra.mxu0 0
          %402 = vmatprep.subr.bf16.mxu0 0
          %403 = vmatpush1.bf16.msra.mxu0 0
          %404 = vmatprep.subr.bf16.mxu0 0
          %405 = vmatpush1.bf16.msra.mxu0 0
          %406 = vmatprep.subr.bf16.mxu0 0
          %407 = vmatpush1.bf16.msra.mxu0 0
          %408 = vmatprep.subr.bf16.mxu0 0
          %409 = vmatpush1.bf16.msra.mxu0 0
          %410 = vmatprep.subr.bf16.mxu0 0
          %411 = vmatpush1.bf16.msra.mxu0 0
          %412 = vmatprep.subr.bf16.mxu0 0
          %413 = vmatpush1.bf16.msra.mxu0 0
          %414 = vmatprep.subr.bf16.mxu0 0
          %415 = vmatpush1.bf16.msra.mxu0 0
          %416 = vmatprep.subr.bf16.mxu0 0
          %417 = vmatpush1.bf16.msra.mxu0 0
          %418 = vmatprep.subr.bf16.mxu0 0
          %419 = vmatpush1.bf16.msra.mxu0 0
          %420 = vmatprep.subr.bf16.mxu0 0
          %421 = vmatpush1.bf16.msra.mxu0 0
          %422 = vmatprep.subr.bf16.mxu0 0
          %423 = vmatpush1.bf16.msra.mxu0 0
          %424 = vmatprep.subr.bf16.mxu0 0
          %425 = vmatpush1.bf16.msra.mxu0 0
          %426 = vmatprep.mubr.bf16.mxu0 0
          %427 = vmatmul.mubr.bf16.gmra.mrb[0].mxu0 %v392
          %v428 = vpop.f32.mrb[0].mxu0
          %v429 = vadd.f32 %v377, %v428
          %v430 = vpop.f32.mrb[0].mxu0
          %v431 = vpop.f32.mrb[0].mxu0
          %v432 = vpop.f32.mrb[0].mxu0
          %433 = vdwg.mxu0
          %v434 = vmul.f32 %v429, 0.5
          %v435 = vmul.f32 %v429, 0.70710677
          %v436 = verf.f32.pop %v435
          %v437 = vadd.f32 %v436, 1.0
          %v438 = vmul.f32 %v434, %v437
          %vm439 = vcmask 130048
          %v440 = vsel %vm439, %v438, 0.0
          %441 = vadd.xlane.f32.xlu0 %v440
          %v442 = vpop.xlane.xlu0 %441
          %v443 = vrcp.pop 16.0
          %v444 = vmul.f32 %v442, %v443
          %v445 = vsub.f32 %v438, %v444
          %v446 = vmul.f32 %v445, %v445
          %v447 = vsel %vm439, %v446, 0.0
          %448 = vadd.xlane.f32.xlu0 %v447
          %v449 = vpop.xlane.xlu0 %448
          %v450 = vrcp.pop 15.0
          %v451 = vmul.f32 %v449, %v450
          %v452 = vrsqrt.pop %v451
          %v453 = vmul.f32 %v451, %v452
          %vm454 = vcmp.eq.f32.partialorder %v451, inf
          %v455 = vsel %vm454, %v451, %v453
          %vm456 = vcmp.eq.f32.partialorder %v451, 0.0
          %v457 = vand.u32 %v451, 2147483648
          %v458 = vsel %vm456, %v457, %v455
          %v459 = vlaneseq
          %v460 = vshrl.u32 %v459, 7
          %v461 = vsub.s32 0, %v460
          %v462 = vrot.slane %v367, %v461
          %v463 = vmul.f32 %v462, %v445
          %v464 = vadd.f32 %v458, 1e-06
          %v465 = vrcp.pop %v464
          %v466 = vmul.f32 %v463, %v465
          %v467 = vlaneseq
          %v468 = vshrl.u32 %v467, 7
          %v469 = vsub.s32 0, %v468
          %v470 = vrot.slane %v368, %v469
          %v471 = vadd.f32 %v466, %v470
          %v472 = vpack.c.bf16 %v471, %v471
          %vm473 = vcmask 125952
          %474 = vst.msk [vmem:[#allocation7] sm:$0xf] %vm473, %v472
          %vm475 = vcmask 7168
          %476 = vst.msk [vmem:[#allocation2] sm:$0xff] %vm475, -inf
          %477 = vst.msk [vmem:[#allocation3] sm:$0xff] %vm475, 0.0
          %478 = vst.msk [vmem:[#allocation4] sm:$0xff] %vm475, 0.0
          %479 = vst.msk [vmem:[#allocation5] sm:$0xff] %vm475, -inf
          %480 = vst.msk [vmem:[#allocation6] sm:$0xff] %vm475, 2147483647
        $region93: #{tpu_custom_call.1} parent=80 // pred_fallthru
          _
        // Predicated region
        $region94: #{tpu_custom_call.1} parent=80 // pred_check
          %p481 = pneg %p353
        $region95: #{tpu_custom_call.1} parent=80 // pred_check_branch
          %483 = sbr.rel (%p481) target = $region97
        $region96: #{tpu_custom_call.1} parent=80 // pred_region
          %v484 = vld [vmem:[#allocation7] sm:$0xf]
          %v485 = vld [vmem:[%s306] sm:$0xf]
          %v486 = vld [vmem:[%s306 + $0x4] sm:$0xf]
          %v487 = vld [vmem:[%s349] sm:$0x1]
          %v489 = vlaneseq
          %v490 = vshrl.u32 %v489, 7
          %v491 = vsub.s32 0, %v490
          %v492 = vrot.slane %v487, %v491
          %v496 = vunpack.c.l.b16 %v485
          %v497 = vunpack.c.l.b16 %v486
          %v498 = vpack.c.b16 %v497, %v496
          %vm500 = vcmask 130048
          %v502 = vsel %vm500, %v484, 0
          %504 = vmatprep.subr.bf16.mxu0 0
          %505 = vmatpush1.bf16.msra.mxu0 %v498
          %506 = vmatprep.subr.bf16.mxu0 0
          %507 = vmatpush1.bf16.msra.mxu0 0
          %508 = vmatprep.subr.bf16.mxu0 0
          %509 = vmatpush1.bf16.msra.mxu0 0
          %510 = vmatprep.subr.bf16.mxu0 0
          %511 = vmatpush1.bf16.msra.mxu0 0
          %512 = vmatprep.subr.bf16.mxu0 0
          %513 = vmatpush1.bf16.msra.mxu0 0
          %514 = vmatprep.subr.bf16.mxu0 0
          %515 = vmatpush1.bf16.msra.mxu0 0
          %516 = vmatprep.subr.bf16.mxu0 0
          %517 = vmatpush1.bf16.msra.mxu0 0
          %518 = vmatprep.subr.bf16.mxu0 0
          %519 = vmatpush1.bf16.msra.mxu0 0
          %520 = vmatprep.subr.bf16.mxu0 0
          %521 = vmatpush1.bf16.msra.mxu0 0
          %522 = vmatprep.subr.bf16.mxu0 0
          %523 = vmatpush1.bf16.msra.mxu0 0
          %524 = vmatprep.subr.bf16.mxu0 0
          %525 = vmatpush1.bf16.msra.mxu0 0
          %526 = vmatprep.subr.bf16.mxu0 0
          %527 = vmatpush1.bf16.msra.mxu0 0
          %528 = vmatprep.subr.bf16.mxu0 0
          %529 = vmatpush1.bf16.msra.mxu0 0
          %530 = vmatprep.subr.bf16.mxu0 0
          %531 = vmatpush1.bf16.msra.mxu0 0
          %532 = vmatprep.subr.bf16.mxu0 0
          %533 = vmatpush1.bf16.msra.mxu0 0
          %534 = vmatprep.subr.bf16.mxu0 0
          %535 = vmatpush1.bf16.msra.mxu0 0
          %536 = vmatprep.mubr.bf16.mxu0 0
          %537 = vmatmul.mubr.bf16.gmra.mrb[0].mxu0 %v502
          %v538 = vpop.f32.mrb[0].mxu0
          %v539 = vadd.f32 %v492, %v538
          %v540 = vpop.f32.mrb[0].mxu0
          %v541 = vpop.f32.mrb[0].mxu0
          %v542 = vpop.f32.mrb[0].mxu0
          %543 = vdwg.mxu0
          %544 = vmax.xlane.f32.xlu0 %v539
          %v545 = vpop.xlane.xlu0 %544
          %v546 = vld [vmem:[#allocation2] sm:$0xff]
          %v547 = vmax.f32 %v546, %v545
          %v548 = vld [vmem:[#allocation3] sm:$0xff]
          %v549 = vsub.f32 %v546, %v547
          %v550 = vmul.f32 %v549, 1.442695
          %v551 = vpow.pop %v550
          %v552 = vmul.f32 %v548, %v551
          %554 = vset.pattern.permute.xlu0 0
          %555 = vperm.xlu0 %554, %v547
          %v556 = vpop.permute.xlu0 %555
          %v558 = vsub.f32 %v539, %v556
          %v559 = vmul.f32 %v558, 1.442695
          %v560 = vpow.pop %v559
          %561 = vadd.xlane.f32.xlu0 %v560
          %v562 = vpop.xlane.xlu0 %561
          %v563 = vadd.f32 %v552, %v562
          %vm564 = vcmask 7168
          %565 = vst.msk [vmem:[#allocation3] sm:$0xff] %vm564, %v563
          %566 = vst.msk [vmem:[#allocation2] sm:$0xff] %vm564, %v547
          %v567 = vld [vmem:[%s346] sm:$0xff]
          %s568 = smul.u32 %s25, 128
          %v569 = vlaneseq
          %v570 = vand.u32 %v569, 127
          %v571 = vstv %s568
          %v572 = vadd.s32 %v571, %v570
          %v573 = vld [vmem:[#allocation4] sm:$0xff]
          %574 = vset.pattern.permute.xlu0 0
          %575 = vperm.xlu0 %574, %v567
          %v576 = vpop.permute.xlu0 %575
          %vm577 = vcmp.eq.s32.totalorder %v572, %v576
          %v578 = vsel %vm577, %v539, 0.0
          %579 = vadd.xlane.f32.xlu0 %v578
          %v580 = vpop.xlane.xlu0 %579
          %v581 = vadd.f32 %v573, %v580
          %582 = vst.msk [vmem:[#allocation4] sm:$0xff] %vm564, %v581
          %vm583 = vcmp.eq.f32.partialorder %v539, %v545
          %v584 = vsel %vm583, %v572, 2147483647
          %v585 = vand.u32 %v584, 65535
          %v586 = vshra.s32 %v584, 16
          %v587 = vcvt.s32.f32 %v585
          %v588 = vcvt.s32.f32 %v586
          %589 = vmin.xlane.f32.xlu0 %v588
          %v590 = vpop.xlane.xlu0 %589
          %vm591 = vcmp.eq.f32.partialorder %v588, %v590
          %v592 = vsel %vm591, %v587, inf
          %593 = vmin.xlane.f32.xlu0 %v592
          %v594 = vpop.xlane.xlu0 %593
          %v595 = vcvt.f32.s32 %v594
          %v596 = vcvt.f32.s32 %v590
          %v597 = vshll.u32 %v596, 16
          %v598 = vadd.s32 %v597, %v595
          %v599 = vld [vmem:[#allocation5] sm:$0xff]
          %vm600 = vcmp.gt.f32.partialorder %v545, %v599
          %v601 = vld [vmem:[#allocation6] sm:$0xff]
          %v602 = vsel %vm600, %v598, %v601
          %603 = vst.msk [vmem:[#allocation6] sm:$0xff] %vm564, %v602
          %v604 = vld [vmem:[#allocation5] sm:$0xff]
          %v605 = vsel %vm600, %v545, %v604
          %606 = vst.msk [vmem:[#allocation5] sm:$0xff] %vm564, %v605
        $region97: #{tpu_custom_call.1} parent=80 // pred_fallthru
          _
        %p607 = pnand %p353, %p355
        %p608 = pneg %p607
        // Predicated region
        $region98: #{tpu_custom_call.1} parent=80 // pred_check
          _
        $region99: #{tpu_custom_call.1} parent=80 // pred_check_branch
          %610 = sbr.rel (%p607) target = $region101
        $region100: #{tpu_custom_call.1} parent=80 // pred_region
          %v611 = vld [vmem:[#allocation2] sm:$0xff]
          %v612 = vld [vmem:[#allocation3] sm:$0xff]
          %v613 = vlog2.pop %v612
          %v614 = vmul.f32 %v613, 0.6931472
          %v615 = vadd.f32 %v611, %v614
          %v616 = vld [vmem:[#allocation4] sm:$0xff]
          %v617 = vsub.f32 %v616, %v615
          %v618 = vld [vmem:[%s346] sm:$0xff]
          %vm619 = vcmp.gt.s32.totalorder %v618, 0
          %v620 = vsel %vm619, 1, 0
          %v621 = vcvt.s32.f32 %v620
          %v622 = vsub.f32 0.0, %v617
          %v623 = vmul.f32 %v622, %v621
          %vm624 = vcmask 7168
          %v625 = vsel %vm624, %v623, 0.0
          %626 = vadd.xlane.f32.xlu0 %v625
          %v627 = vpop.xlane.xlu0 %626
          %v628 = vrot.slane %v627, 4
          %v629 = vadd.f32 %v627, %v628
          %v630 = vrot.slane %v629, 2
          %v631 = vadd.f32 %v629, %v630
          %v632 = vrot.slane %v631, 1
          %v633 = vadd.f32 %v631, %v632
          %s634 = vtos %v633
          %v635 = vsel %vm624, %v621, 0.0
          %636 = vadd.xlane.f32.xlu0 %v635
          %v637 = vpop.xlane.xlu0 %636
          %v638 = vrot.slane %v637, 4
          %v639 = vadd.f32 %v637, %v638
          %v640 = vrot.slane %v639, 2
          %v641 = vadd.f32 %v639, %v640
          %v642 = vrot.slane %v641, 1
          %v643 = vadd.f32 %v641, %v642
          %s644 = vtos %v643
          %v645 = vld [vmem:[#allocation6] sm:$0xff]
          %vm646 = vcmp.eq.s32.totalorder %v645, %v618
          %vm647 = vmand %vm619, %vm646
          %v648 = vsel %vm647, 1.0, 0.0
          %v649 = vsel %vm624, %v648, 0.0
          %650 = vadd.xlane.f32.xlu0 %v649
          %v651 = vpop.xlane.xlu0 %650
          %v652 = vrot.slane %v651, 4
          %v653 = vadd.f32 %v651, %v652
          %v654 = vrot.slane %v653, 2
          %v655 = vadd.f32 %v653, %v654
          %v656 = vrot.slane %v655, 1
          %v657 = vadd.f32 %v655, %v656
          %s658 = vtos %v657
          %v659 = vlaneseq
          %v660 = vand.u32 %v659, 127
          %v661 = vlaneseq
          %v662 = vshrl.u32 %v661, 7
          %vm663 = vcmp.eq.s32.totalorder %v660, 0
          %vm664 = vcmp.eq.s32.totalorder %v660, 1
          %vm665 = vcmp.eq.s32.totalorder %v660, 2
          %v666 = vstv %s658
          %v667 = vsel %vm665, %v666, 0.0
          %v668 = vstv %s644
          %v669 = vsel %vm664, %v668, %v667
          %v670 = vstv %s634
          %v671 = vsel %vm663, %v670, %v669
          %vm672 = vcmp.eq.s32.totalorder %v662, 0
          %v673 = vsel %vm672, %v671, 0.0
          %674 = vst [vmem:[#allocation11] sm:$0xff] %v673
        $region101: #{tpu_custom_call.1} parent=80 // pred_fallthru
          _
        // Predicated region
        $region102: #{tpu_custom_call.1} parent=80 // pred_check
          %p675 = pneg %p196
        $region103: #{tpu_custom_call.1} parent=80 // pred_check_branch
          %677 = sbr.rel (%p675) target = $region105
        $region104: #{tpu_custom_call.1} parent=80 // pred_region
          %s679 = ssub.s32 128, 128
          %680 = vsyncadd [#allocation12], %s679
          %s681 = smul.addr %s24, 128
          %s682 = scalar_lea.hbm %s7, %s681
          %s684 = sshll.u32 [#allocation11], 4
          %s685 = int_to_ptr.vmem [resolvable:$true] %s684
          %687 = dma.vmem_to_hbm [thread:$0]  %s685, 128, %s682, [#allocation12]
        $region105: #{tpu_custom_call.1} parent=80 // pred_fallthru
          _
        // Predicated region
        $region106: #{tpu_custom_call.1} parent=80 // pred_check
          %p688 = pneg %p196
        $region107: #{tpu_custom_call.1} parent=80 // pred_check_branch
          %690 = sbr.rel (%p688) target = $region109
        $region108: #{tpu_custom_call.1} parent=80 // pred_region
          %691 = dma.done [#allocation12], 128
        $region109: #{tpu_custom_call.1} parent=80 // pred_fallthru
          _
      $region81: #{tpu_custom_call.1} parent=5 // pred_fallthru
        _
      %p692 = scmp.le.s32.totalorder 2, %s15
      // Predicated region
      $region110: #{tpu_custom_call.1} parent=5 // pred_check
        %p693 = pneg %p692
      $region111: #{tpu_custom_call.1} parent=5 // pred_check_branch
        %695 = sbr.rel (%p693) target = $region113
      $region112: #{tpu_custom_call.1} parent=5 // pred_region
        %s696 = ssub.s32 %s15, 2
      $region113: #{tpu_custom_call.1} parent=5 // pred_fallthru
        _
    $region6: #{tpu_custom_call.1} parent=1 // loop_footer
      %s19 = sadd.s32 1, %s15
    $region7: #{tpu_custom_call.1} parent=1 // loop_footer_branch
      %14 = sbr.rel target = $region3
    $region8: #{tpu_custom_call.1} parent=1 // loop_exit
      _
    %697 = vsyncpa [#allocation12], 1
    %s698 = scalar_lea.sflag [#allocation12], 1
    %699 = vsyncpa %s698, 1

</llo_original>
